<compile_context>
chip_gen: v5e
topology: v5e:2x2
jax: 0.10.0
libtpu: 0.0.40
codegen_flags: <defaults>
</compile_context>

<pallas_src>
import jax
import jax.numpy as jnp
from jax.experimental import pallas as pl
from jax.experimental.pallas import tpu as pltpu

H1, H2 = 128, 256        # hidden widths of the PyTorch module
N_PAD = 128              # MXU-aligned lane width for the last matmul only


def _cdiv(a, b):
    return (a + b - 1) // b


def _round_up(x, m):
    return _cdiv(x, m) * m


def qnetwork_kernel(x_ref, w1_ref, b1_ref, w2_ref, b2_ref, w3_ref, b3_ref,
                    o_ref, h1_ref, h2_ref):
    # layer 1: (TB, n_state) f32 @ (n_state, 128) f32 -> f32, +b1, ReLU.
    # n_state is tiny (e.g. 4), so this layer stays f32 and the state needs
    # no wrapper-side cast or lane padding at all.
    a1 = jnp.dot(x_ref[...], w1_ref[...], preferred_element_type=jnp.float32)
    h1_ref[...] = jnp.maximum(a1 + b1_ref[...], 0.0).astype(h1_ref.dtype)

    # layer 2: (TB, 128) bf16 @ (128, 256) bf16 -> f32 accumulate, +b2, ReLU
    a2 = jnp.dot(h1_ref[...], w2_ref[...], preferred_element_type=jnp.float32)
    h2_ref[...] = jnp.maximum(a2 + b2_ref[...], 0.0).astype(h2_ref.dtype)

    # layer 3: (TB, 256) bf16 @ (256, 128) bf16 -> f32.  Only the first
    # n_action lanes are real Q-values; slice before the narrow store so the
    # HBM output stays (B_pad, n_action).
    a3 = jnp.dot(h2_ref[...], w3_ref[...], preferred_element_type=jnp.float32)
    n_act = o_ref.shape[1]
    o_ref[...] = (a3[:, :n_act] + b3_ref[...]).astype(o_ref.dtype)


def qnetwork_forward(state, params, *, tb_max=1024, num_cores=2):
    """state: (B, n_state) float32.  params: dict with w1,b1,w2,b2,w3,b3
    (float32, weights stored (in, out))."""
    B, n_state = state.shape
    n_action = params["w3"].shape[1]

    # ---- batch tiling: balanced tiles, rows a multiple of 8, tile count a
    # multiple of num_cores (v7x has 2 TCs; no-op on v5e/v6e) when B is split.
    num_tiles = max(1, _cdiv(B, tb_max))
    if num_tiles > 1:
        num_tiles = _round_up(num_tiles, num_cores)
    TB = _round_up(_cdiv(B, num_tiles), 8)
    B_pad = TB * num_tiles

    # raw f32 state; only pad batch rows when B is not a tile multiple.
    x = state if B_pad == B else jnp.pad(state, ((0, B_pad - B), (0, 0)))

    # weights: layer-1 stays f32 (n_state x 128 is tiny); layers 2/3 bf16.
    # Only w3 is lane-padded (one-time, 64 KB) so the last matmul keeps N=128.
    w1 = params["w1"].astype(jnp.float32)
    w2 = params["w2"].astype(jnp.bfloat16)
    w3 = jnp.zeros((H2, N_PAD), jnp.bfloat16).at[:, :n_action].set(
        params["w3"].astype(jnp.bfloat16))
    b1 = params["b1"].astype(jnp.float32).reshape(1, H1)
    b2 = params["b2"].astype(jnp.float32).reshape(1, H2)
    b3 = params["b3"].astype(jnp.float32).reshape(1, n_action)

    # full-array blocks with constant index maps -> fetched once, held
    # resident in VMEM across every batch tile (no per-step re-DMA).
    def resident(shape):
        return pl.BlockSpec(shape, lambda i: (0, 0))

    out = pl.pallas_call(
        qnetwork_kernel,
        out_shape=jax.ShapeDtypeStruct((B_pad, n_action), jnp.float32),
        grid=(num_tiles,),
        in_specs=[
            pl.BlockSpec((TB, n_state), lambda i: (i, 0)),      # state tile
            resident((n_state, H1)), resident((1, H1)),         # w1, b1
            resident((H1, H2)),      resident((1, H2)),         # w2, b2
            resident((H2, N_PAD)),   resident((1, n_action)),   # w3, b3
        ],
        out_specs=pl.BlockSpec((TB, n_action), lambda i: (i, 0)),
        scratch_shapes=[
            pltpu.VMEM((TB, H1), jnp.bfloat16),                 # h1
            pltpu.VMEM((TB, H2), jnp.bfloat16),                 # h2
        ],
        compiler_params=pltpu.CompilerParams(
            dimension_semantics=("parallel",),                  # 2 TCs on v7x
            vmem_limit_bytes=32 * 1024 * 1024,
        ),
    )(x, w1, b1, w2, b2, w3, b3)

    return out if B_pad == B else out[:B]


def init_params(key, n_state, n_action):
    """Mirror the PyTorch module: weights ~ N(0, 0.1); biases keep nn.Linear's
    default U(-1/sqrt(fan_in), 1/sqrt(fan_in))."""
    ks = jax.random.split(key, 6)

    def linear(kw, kb, fan_in, fan_out):
        w = 0.1 * jax.random.normal(kw, (fan_in, fan_out), dtype=jnp.float32)
        bound = 1.0 / jnp.sqrt(jnp.float32(fan_in))
        b = jax.random.uniform(kb, (1, fan_out), dtype=jnp.float32,
                               minval=-bound, maxval=bound)
        return w, b

    w1, b1 = linear(ks[0], ks[1], n_state, H1)
    w2, b2 = linear(ks[2], ks[3], H1, H2)
    w3, b3 = linear(ks[4], ks[5], H2, n_action)
    return {"w1": w1, "b1": b1, "w2": w2, "b2": b2, "w3": w3, "b3": b3}


def reference_forward(state, p):
    h1 = jnp.maximum(state @ p["w1"] + p["b1"], 0.0)
    h2 = jnp.maximum(h1 @ p["w2"] + p["b2"], 0.0)
    return h2 @ p["w3"] + p["b3"]


if __name__ == "__main__":
    key = jax.random.PRNGKey(0)
    k_param, k_small, k_large = jax.random.split(key, 3)

    n_state, n_action = 4, 2          # CartPole-like sizes
    params = init_params(k_param, n_state, n_action)

    # small RL acting batch: single grid step, zero wrapper pre/post ops
    state_small = jax.random.normal(k_small, (8, n_state), dtype=jnp.float32)
    out_small = jax.block_until_ready(qnetwork_forward(state_small, params))
    ref_small = reference_forward(state_small, params)
    assert out_small.shape == (8, n_action)
    assert jnp.allclose(out_small, ref_small, atol=5e-2, rtol=5e-2)

    # replay-buffer batch: 2 balanced tiles of 520 rows, no batch padding
    state_large = jax.random.normal(k_large, (1040, n_state), dtype=jnp.float32)
    out_large = jax.block_until_ready(qnetwork_forward(state_large, params))
    ref_large = reference_forward(state_large, params)
    assert out_large.shape == (1040, n_action)
    assert jnp.allclose(out_large, ref_large, atol=5e-2, rtol=5e-2)

    print("KERNEL_OK")
</pallas_src>

<mosaic_0001>
module attributes {stable_mosaic.version = 11 : i64} {
  func.func @qnetwork_kernel(%arg0: i32, %arg1: memref<8x4xf32, #tpu.memory_space<vmem>>, %arg2: memref<4x128xf32, #tpu.memory_space<vmem>>, %arg3: memref<1x128xf32, #tpu.memory_space<vmem>>, %arg4: memref<128x256xbf16, #tpu.memory_space<vmem>>, %arg5: memref<1x256xf32, #tpu.memory_space<vmem>>, %arg6: memref<256x128xbf16, #tpu.memory_space<vmem>>, %arg7: memref<1x2xf32, #tpu.memory_space<vmem>>, %arg8: memref<8x2xf32, #tpu.memory_space<vmem>>, %arg9: memref<8x128xbf16, #tpu.memory_space<vmem>>, %arg10: memref<8x256xbf16, #tpu.memory_space<vmem>>) attributes {dimension_semantics = [#tpu.dimension_semantics<parallel>], iteration_bounds = array<i64: 1>, scalar_prefetch = 0 : i64, scratch_operands = 2 : i64, tpu.core_type = #tpu.core_type<tc>, window_params = [{transform_indices = @transform_0, window_bounds = array<i64: 8, 4>}, {pipeline_mode = #tpu.pipeline_mode<synchronous>, transform_indices = @transform_1, window_bounds = array<i64: 4, 128>}, {pipeline_mode = #tpu.pipeline_mode<synchronous>, transform_indices = @transform_2, window_bounds = array<i64: 1, 128>}, {pipeline_mode = #tpu.pipeline_mode<synchronous>, transform_indices = @transform_3, window_bounds = array<i64: 128, 256>}, {pipeline_mode = #tpu.pipeline_mode<synchronous>, transform_indices = @transform_4, window_bounds = array<i64: 1, 256>}, {pipeline_mode = #tpu.pipeline_mode<synchronous>, transform_indices = @transform_5, window_bounds = array<i64: 256, 128>}, {pipeline_mode = #tpu.pipeline_mode<synchronous>, transform_indices = @transform_6, window_bounds = array<i64: 1, 2>}, {transform_indices = @transform_7, window_bounds = array<i64: 8, 2>}]} {
    %c0 = arith.constant 0 : index
    %c0_0 = arith.constant 0 : index
    %0 = vector.load %arg1[%c0, %c0_0] : memref<8x4xf32, #tpu.memory_space<vmem>>, vector<8x4xf32>
    %c0_1 = arith.constant 0 : index
    %c0_2 = arith.constant 0 : index
    %1 = vector.load %arg2[%c0_1, %c0_2] : memref<4x128xf32, #tpu.memory_space<vmem>>, vector<4x128xf32>
    %cst = arith.constant dense<0.000000e+00> : vector<8x128xf32>
    %2 = tpu.matmul %0, %1, %cst {dimension_numbers = #tpu.dot_dimension_numbers<[1], [0], [0], [1], [0, 0, 1, 1], [], []>} : vector<8x4xf32>, vector<4x128xf32>, vector<8x128xf32> -> vector<8x128xf32>
    %c0_3 = arith.constant 0 : index
    %c0_4 = arith.constant 0 : index
    %3 = vector.load %arg3[%c0_3, %c0_4] : memref<1x128xf32, #tpu.memory_space<vmem>>, vector<1x128xf32>
    %4 = vector.broadcast %3 : vector<1x128xf32> to vector<8x128xf32>
    %5 = arith.addf %2, %4 : vector<8x128xf32>
    %cst_5 = arith.constant 0.000000e+00 : f32
    %6 = vector.broadcast %cst_5 : f32 to vector<8x128xf32>
    %7 = arith.maximumf %5, %6 : vector<8x128xf32>
    %8 = arith.truncf %7 : vector<8x128xf32> to vector<8x128xbf16>
    %c0_6 = arith.constant 0 : index
    %c0_7 = arith.constant 0 : index
    %9 = vector.load %arg9[%c0_6, %c0_7] : memref<8x128xbf16, #tpu.memory_space<vmem>>, vector<8x128xbf16>
    tpu.vector_store %arg9[%c0_6, %c0_7], %8 {strides = array<i32>} : memref<8x128xbf16, #tpu.memory_space<vmem>>, vector<8x128xbf16>,
    %c0_8 = arith.constant 0 : index
    %c0_9 = arith.constant 0 : index
    %10 = vector.load %arg9[%c0_8, %c0_9] : memref<8x128xbf16, #tpu.memory_space<vmem>>, vector<8x128xbf16>
    %c0_10 = arith.constant 0 : index
    %c0_11 = arith.constant 0 : index
    %11 = vector.load %arg4[%c0_10, %c0_11] : memref<128x256xbf16, #tpu.memory_space<vmem>>, vector<128x256xbf16>
    %cst_12 = arith.constant dense<0.000000e+00> : vector<8x256xf32>
    %12 = tpu.matmul %10, %11, %cst_12 {dimension_numbers = #tpu.dot_dimension_numbers<[1], [0], [0], [1], [0, 0, 1, 1], [], []>} : vector<8x128xbf16>, vector<128x256xbf16>, vector<8x256xf32> -> vector<8x256xf32>
    %c0_13 = arith.constant 0 : index
    %c0_14 = arith.constant 0 : index
    %13 = vector.load %arg5[%c0_13, %c0_14] : memref<1x256xf32, #tpu.memory_space<vmem>>, vector<1x256xf32>
    %14 = vector.broadcast %13 : vector<1x256xf32> to vector<8x256xf32>
    %15 = arith.addf %12, %14 : vector<8x256xf32>
    %cst_15 = arith.constant 0.000000e+00 : f32
    %16 = vector.broadcast %cst_15 : f32 to vector<8x256xf32>
    %17 = arith.maximumf %15, %16 : vector<8x256xf32>
    %18 = arith.truncf %17 : vector<8x256xf32> to vector<8x256xbf16>
    %c0_16 = arith.constant 0 : index
    %c0_17 = arith.constant 0 : index
    %19 = vector.load %arg10[%c0_16, %c0_17] : memref<8x256xbf16, #tpu.memory_space<vmem>>, vector<8x256xbf16>
    tpu.vector_store %arg10[%c0_16, %c0_17], %18 {strides = array<i32>} : memref<8x256xbf16, #tpu.memory_space<vmem>>, vector<8x256xbf16>,
    %c0_18 = arith.constant 0 : index
    %c0_19 = arith.constant 0 : index
    %20 = vector.load %arg10[%c0_18, %c0_19] : memref<8x256xbf16, #tpu.memory_space<vmem>>, vector<8x256xbf16>
    %c0_20 = arith.constant 0 : index
    %c0_21 = arith.constant 0 : index
    %21 = vector.load %arg6[%c0_20, %c0_21] : memref<256x128xbf16, #tpu.memory_space<vmem>>, vector<256x128xbf16>
    %cst_22 = arith.constant dense<0.000000e+00> : vector<8x128xf32>
    %22 = tpu.matmul %20, %21, %cst_22 {dimension_numbers = #tpu.dot_dimension_numbers<[1], [0], [0], [1], [0, 0, 1, 1], [], []>} : vector<8x256xbf16>, vector<256x128xbf16>, vector<8x128xf32> -> vector<8x128xf32>
    %23 = vector.extract_strided_slice %22 {offsets = [0, 0], sizes = [8, 2], strides = [1, 1]} : vector<8x128xf32> to vector<8x2xf32>
    %c0_23 = arith.constant 0 : index
    %c0_24 = arith.constant 0 : index
    %24 = vector.load %arg7[%c0_23, %c0_24] : memref<1x2xf32, #tpu.memory_space<vmem>>, vector<1x2xf32>
    %25 = vector.broadcast %24 : vector<1x2xf32> to vector<8x2xf32>
    %26 = arith.addf %23, %25 : vector<8x2xf32>
    %c0_25 = arith.constant 0 : index
    %c0_26 = arith.constant 0 : index
    %27 = vector.load %arg8[%c0_25, %c0_26] : memref<8x2xf32, #tpu.memory_space<vmem>>, vector<8x2xf32>
    tpu.vector_store %arg8[%c0_25, %c0_26], %26 {strides = array<i32>} : memref<8x2xf32, #tpu.memory_space<vmem>>, vector<8x2xf32>,
    return
  }
  func.func @transform_0(%arg0: i32) -> (i32, i32) {
    %c0_i32 = arith.constant 0 : i32
    %c0_i32_0 = arith.constant 0 : i32
    return %arg0, %c0_i32 : i32, i32
  }
  func.func @transform_1(%arg0: i32) -> (i32, i32) {
    %c0_i32 = arith.constant 0 : i32
    %c0_i32_0 = arith.constant 0 : i32
    %c0_i32_1 = arith.constant 0 : i32
    return %c0_i32, %c0_i32_0 : i32, i32
  }
  func.func @transform_2(%arg0: i32) -> (i32, i32) {
    %c0_i32 = arith.constant 0 : i32
    %c0_i32_0 = arith.constant 0 : i32
    %c0_i32_1 = arith.constant 0 : i32
    return %c0_i32, %c0_i32_0 : i32, i32
  }
  func.func @transform_3(%arg0: i32) -> (i32, i32) {
    %c0_i32 = arith.constant 0 : i32
    %c0_i32_0 = arith.constant 0 : i32
    %c0_i32_1 = arith.constant 0 : i32
    return %c0_i32, %c0_i32_0 : i32, i32
  }
  func.func @transform_4(%arg0: i32) -> (i32, i32) {
    %c0_i32 = arith.constant 0 : i32
    %c0_i32_0 = arith.constant 0 : i32
    %c0_i32_1 = arith.constant 0 : i32
    return %c0_i32, %c0_i32_0 : i32, i32
  }
  func.func @transform_5(%arg0: i32) -> (i32, i32) {
    %c0_i32 = arith.constant 0 : i32
    %c0_i32_0 = arith.constant 0 : i32
    %c0_i32_1 = arith.constant 0 : i32
    return %c0_i32, %c0_i32_0 : i32, i32
  }
  func.func @transform_6(%arg0: i32) -> (i32, i32) {
    %c0_i32 = arith.constant 0 : i32
    %c0_i32_0 = arith.constant 0 : i32
    %c0_i32_1 = arith.constant 0 : i32
    return %c0_i32, %c0_i32_0 : i32, i32
  }
  func.func @transform_7(%arg0: i32) -> (i32, i32) {
    %c0_i32 = arith.constant 0 : i32
    %c0_i32_0 = arith.constant 0 : i32
    return %arg0, %c0_i32 : i32, i32
  }
}

</mosaic_0001>

<llo_original>
// kernel: tpu_custom_call.1
$region0: #{tpu_custom_call.1}
  #allocation0 [shape = 'u32[]', space=smem, size = 0x4, offset = 0x4, fixed_abs, tag = 'smem constant byte address 0x4 - core index']
  #allocation1 [shape = 'u32[72,128]{1,0:T(1,128)}', space=vmem, size = 0x9000, scoped, tag = 'internal scratch']
  #allocation2 [shape = 'bf16[8,128]{1,0:T(8,128)(2,1)}', space=vmem, size = 0x800, scoped, tag = 'scratch operand']
  #allocation3 [shape = 'bf16[8,256]{1,0:T(8,128)(2,1)}', space=vmem, size = 0x1000, scoped, tag = 'scratch operand']
  %s0 = inlined_call_operand.vmem [shape: f32[8,4], index: 0, kind: input, shape index: {}]
  %s1 = inlined_call_operand.vmem [shape: f32[4,128], index: 1, kind: input, shape index: {}]
  %s2 = inlined_call_operand.vmem [shape: f32[1,128], index: 2, kind: input, shape index: {}]
  %s3 = inlined_call_operand.hbm [shape: bf16[128,256], index: 3, kind: input, shape index: {}]
  %s4 = inlined_call_operand.vmem [shape: f32[1,256], index: 4, kind: input, shape index: {}]
  %s5 = inlined_call_operand.hbm [shape: bf16[256,128], index: 5, kind: input, shape index: {}]
  %s6 = inlined_call_operand.vmem [shape: f32[1,2], index: 6, kind: input, shape index: {}]
  %s7 = inlined_call_operand.vmem [shape: f32[8,2], index: 7, kind: output, shape index: {}]
  %s8 = sld [smem:[#allocation0]]
  $region46: #{tpu_custom_call.1} parent=0
    _
  %s10 = ssub.s32 1, %s8
  %s11 = scalar_select 0, %s10, %s8
  $region1: #{tpu_custom_call.1} parent=0
    #allocation4 [shape = 'u8[65536]{0}', space=vmem, size = 0x10000, scoped, tag = 'input window, operand 3, single buffered']
    #allocation5 [shape = 's32[1]{0}', space=sflag, size = 0x4, scoped, tag = 'scoped memory for tpu_custom_call.1']
    #allocation6 [shape = 'u8[65536]{0}', space=vmem, size = 0x10000, scoped, tag = 'input window, operand 5, single buffered']
    #allocation7 [shape = 's32[1]{0}', space=sflag, size = 0x4, scoped, tag = 'scoped memory for tpu_custom_call.1']
    %12 = vsyncpa [#allocation5], 0
    %13 = vsyncpa [#allocation7], 0
    // Predicated region
    $region2: #{tpu_custom_call.1} parent=1 // pred_check
      _
    $region3: #{tpu_custom_call.1} parent=1 // pred_check_branch
      %15 = sbr.rel (0) target = $region5
    $region4: #{tpu_custom_call.1} parent=1 // pred_region
      _
    $region5: #{tpu_custom_call.1} parent=1 // pred_fallthru
      _
    // Predicated region
    $region6: #{tpu_custom_call.1} parent=1 // pred_check
      _
    $region7: #{tpu_custom_call.1} parent=1 // pred_check_branch
      %17 = sbr.rel (0) target = $region9
    $region8: #{tpu_custom_call.1} parent=1 // pred_region
      _
    $region9: #{tpu_custom_call.1} parent=1 // pred_fallthru
      _
    // Predicated region
    $region10: #{tpu_custom_call.1} parent=1 // pred_check
      _
    $region11: #{tpu_custom_call.1} parent=1 // pred_check_branch
      %19 = sbr.rel (0) target = $region13
    $region12: #{tpu_custom_call.1} parent=1 // pred_region
      _
    $region13: #{tpu_custom_call.1} parent=1 // pred_fallthru
      _
    // Predicated region
    $region14: #{tpu_custom_call.1} parent=1 // pred_check
      _
    $region15: #{tpu_custom_call.1} parent=1 // pred_check_branch
      %21 = sbr.rel (0) target = $region17
    $region16: #{tpu_custom_call.1} parent=1 // pred_region
      %23 = vsyncadd [#allocation5], 0
      %s24 = sshll.u32 %s3, 4
      %s25 = int_to_ptr.hbm [resolvable:$true] %s24
      %s26 = sshll.u32 [#allocation4], 4
      %s27 = int_to_ptr.vmem [resolvable:$true] %s26
      %32 = dma.hbm_to_vmem [thread:$0]  %s25, 2048, %s27, [#allocation5], 128, 128, 8
    $region17: #{tpu_custom_call.1} parent=1 // pred_fallthru
      _
    // Predicated region
    $region18: #{tpu_custom_call.1} parent=1 // pred_check
      _
    $region19: #{tpu_custom_call.1} parent=1 // pred_check_branch
      %34 = sbr.rel (0) target = $region21
    $region20: #{tpu_custom_call.1} parent=1 // pred_region
      _
    $region21: #{tpu_custom_call.1} parent=1 // pred_fallthru
      _
    // Predicated region
    $region22: #{tpu_custom_call.1} parent=1 // pred_check
      _
    $region23: #{tpu_custom_call.1} parent=1 // pred_check_branch
      %36 = sbr.rel (0) target = $region25
    $region24: #{tpu_custom_call.1} parent=1 // pred_region
      %38 = vsyncadd [#allocation7], 0
      %s39 = sshll.u32 %s5, 4
      %s40 = int_to_ptr.hbm [resolvable:$true] %s39
      %s41 = sshll.u32 [#allocation6], 4
      %s42 = int_to_ptr.vmem [resolvable:$true] %s41
      %47 = dma.hbm_to_vmem [thread:$0]  %s40, 2048, %s42, [#allocation7], 64, 64, 4
    $region25: #{tpu_custom_call.1} parent=1 // pred_fallthru
      _
    // Predicated region
    $region26: #{tpu_custom_call.1} parent=1 // pred_check
      _
    $region27: #{tpu_custom_call.1} parent=1 // pred_check_branch
      %49 = sbr.rel (0) target = $region29
    $region28: #{tpu_custom_call.1} parent=1 // pred_region
      _
    $region29: #{tpu_custom_call.1} parent=1 // pred_fallthru
      _
    // Predicated region
    $region30: #{tpu_custom_call.1} parent=1 // pred_check
      _
    $region31: #{tpu_custom_call.1} parent=1 // pred_check_branch
      %51 = sbr.rel (0) target = $region33
    $region32: #{tpu_custom_call.1} parent=1 // pred_region
      %53 = dma.done [#allocation5], 2048
    $region33: #{tpu_custom_call.1} parent=1 // pred_fallthru
      _
    // Predicated region
    $region34: #{tpu_custom_call.1} parent=1 // pred_check
      _
    $region35: #{tpu_custom_call.1} parent=1 // pred_check_branch
      %55 = sbr.rel (0) target = $region37
    $region36: #{tpu_custom_call.1} parent=1 // pred_region
      %57 = dma.done [#allocation7], 2048
    $region37: #{tpu_custom_call.1} parent=1 // pred_fallthru
      _
    %v58 = vld [vmem:[%s0] sm:$0xff]
    %v59 = vld [vmem:[%s1] sm:$0xf]
    %v60 = vld [vmem:[%s2] sm:$0x1]
    %v62 = vperm.slane %v60, 0
    %vm64 = vcmask 31744
    %v66 = vsel %vm64, %v58, 0
    %vm68 = vcmask 1043456
    %v70 = vsel %vm68, %v59, 0
    %72 = vmatpush.msra.mxu0 0.0
    %73 = vmatpush.msra.mxu0 0.0
    %74 = vmatpush.msra.mxu0 0.0
    %75 = vmatpush.msra.mxu0 0.0
    %76 = vmatpush.msra.mxu0 0.0
    %77 = vmatpush.msra.mxu0 0.0
    %78 = vmatpush.msra.mxu0 0.0
    %79 = vmatpush.msra.mxu0 0.0
    %80 = vmatpush.msra.mxu0 0.0
    %81 = vmatpush.msra.mxu0 0.0
    %82 = vmatpush.msra.mxu0 0.0
    %83 = vmatpush.msra.mxu0 0.0
    %84 = vmatpush.msra.mxu0 0.0
    %85 = vmatpush.msra.mxu0 0.0
    %86 = vmatpush.msra.mxu0 0.0
    %87 = vmatpush.msra.mxu0 %v70
    %88 = vmatmul.f32.gmra.mxu0 %v66
    %v89 = vpop.f32.mrf.mxu0
    %v90 = vadd.f32 %v62, %v89
    %91 = vdwg.mxu0
    %v92 = vmax.f32 %v90, 0.0
    %v93 = vpack.c.bf16 %v92, %v92
    %94 = vst [vmem:[#allocation2] sm:$0xf] %v93
    %v95 = vld [vmem:[#allocation2] sm:$0xf]
    %v96 = vld [vmem:[#allocation4] sm:$0xff]
    %v97 = vld [vmem:[#allocation4 + $0x8] sm:$0xff]
    %v98 = vld [vmem:[#allocation4 + $0x10] sm:$0xff]
    %v99 = vld [vmem:[#allocation4 + $0x18] sm:$0xff]
    %v100 = vld [vmem:[#allocation4 + $0x20] sm:$0xff]
    %v101 = vld [vmem:[#allocation4 + $0x28] sm:$0xff]
    %v102 = vld [vmem:[#allocation4 + $0x30] sm:$0xff]
    %v103 = vld [vmem:[#allocation4 + $0x38] sm:$0xff]
    %v104 = vld [vmem:[#allocation4 + $0x40] sm:$0xff]
    %v105 = vld [vmem:[#allocation4 + $0x48] sm:$0xff]
    %v106 = vld [vmem:[#allocation4 + $0x50] sm:$0xff]
    %v107 = vld [vmem:[#allocation4 + $0x58] sm:$0xff]
    %v108 = vld [vmem:[#allocation4 + $0x60] sm:$0xff]
    %v109 = vld [vmem:[#allocation4 + $0x68] sm:$0xff]
    %v110 = vld [vmem:[#allocation4 + $0x70] sm:$0xff]
    %v111 = vld [vmem:[#allocation4 + $0x78] sm:$0xff]
    %v112 = vld [vmem:[%s4] sm:$0x3]
    %v114 = vperm.slane %v112, 0
    %v115 = vperm.slane %v112, 1
    %v134 = vunpack.c.l.b16 %v96
    %v135 = vunpack.c.h.b16 %v96
    %v136 = vunpack.c.l.b16 %v97
    %v137 = vunpack.c.h.b16 %v97
    %v138 = vunpack.c.l.b16 %v98
    %v139 = vunpack.c.h.b16 %v98
    %v140 = vunpack.c.l.b16 %v99
    %v141 = vunpack.c.h.b16 %v99
    %v142 = vunpack.c.l.b16 %v100
    %v143 = vunpack.c.h.b16 %v100
    %v144 = vunpack.c.l.b16 %v101
    %v145 = vunpack.c.h.b16 %v101
    %v146 = vunpack.c.l.b16 %v102
    %v147 = vunpack.c.h.b16 %v102
    %v148 = vunpack.c.l.b16 %v103
    %v149 = vunpack.c.h.b16 %v103
    %v150 = vunpack.c.l.b16 %v104
    %v151 = vunpack.c.h.b16 %v104
    %v152 = vunpack.c.l.b16 %v105
    %v153 = vunpack.c.h.b16 %v105
    %v154 = vunpack.c.l.b16 %v106
    %v155 = vunpack.c.h.b16 %v106
    %v156 = vunpack.c.l.b16 %v107
    %v157 = vunpack.c.h.b16 %v107
    %v158 = vunpack.c.l.b16 %v108
    %v159 = vunpack.c.h.b16 %v108
    %v160 = vunpack.c.l.b16 %v109
    %v161 = vunpack.c.h.b16 %v109
    %v162 = vunpack.c.l.b16 %v110
    %v163 = vunpack.c.h.b16 %v110
    %v164 = vunpack.c.l.b16 %v111
    %v165 = vunpack.c.h.b16 %v111
    %v166 = vpack.c.b16 %v136, %v134
    %v167 = vpack.c.b16 %v137, %v135
    %v168 = vpack.c.b16 %v140, %v138
    %v169 = vpack.c.b16 %v141, %v139
    %v170 = vpack.c.b16 %v144, %v142
    %v171 = vpack.c.b16 %v145, %v143
    %v172 = vpack.c.b16 %v148, %v146
    %v173 = vpack.c.b16 %v149, %v147
    %v174 = vpack.c.b16 %v152, %v150
    %v175 = vpack.c.b16 %v153, %v151
    %v176 = vpack.c.b16 %v156, %v154
    %v177 = vpack.c.b16 %v157, %v155
    %v178 = vpack.c.b16 %v160, %v158
    %v179 = vpack.c.b16 %v161, %v159
    %v180 = vpack.c.b16 %v164, %v162
    %v181 = vpack.c.b16 %v165, %v163
    %198 = vmatpush.bf16.msra.mxu0 %v180
    %199 = vmatpush.bf16.msra.mxu0 %v178
    %200 = vmatpush.bf16.msra.mxu0 %v176
    %201 = vmatpush.bf16.msra.mxu0 %v174
    %202 = vmatpush.bf16.msra.mxu0 %v172
    %203 = vmatpush.bf16.msra.mxu0 %v170
    %204 = vmatpush.bf16.msra.mxu0 %v168
    %205 = vmatpush.bf16.msra.mxu0 %v166
    %206 = vmatmul.bf16.gmra.mxu0 %v95
    %v207 = vpop.f32.mrf.mxu0
    %v208 = vadd.f32 %v114, %v207
    %v209 = vpop.f32.mrf.mxu0
    %210 = vdwg.mxu0
    %211 = vmatpush.bf16.msra.mxu0 %v181
    %212 = vmatpush.bf16.msra.mxu0 %v179
    %213 = vmatpush.bf16.msra.mxu0 %v177
    %214 = vmatpush.bf16.msra.mxu0 %v175
    %215 = vmatpush.bf16.msra.mxu0 %v173
    %216 = vmatpush.bf16.msra.mxu0 %v171
    %217 = vmatpush.bf16.msra.mxu0 %v169
    %218 = vmatpush.bf16.msra.mxu0 %v167
    %219 = vmatmul.bf16.gmra.mxu0 %v95
    %v220 = vpop.f32.mrf.mxu0
    %v221 = vadd.f32 %v115, %v220
    %v222 = vpop.f32.mrf.mxu0
    %223 = vdwg.mxu0
    %v224 = vmax.f32 %v208, 0.0
    %v225 = vmax.f32 %v221, 0.0
    %v226 = vpack.c.bf16 %v225, %v224
    %227 = vst [vmem:[#allocation3] sm:$0xff] %v226
    %v228 = vld [vmem:[#allocation3] sm:$0xff]
    %v229 = vld [vmem:[#allocation6] sm:$0xf]
    %v230 = vld [vmem:[#allocation6 + $0x4] sm:$0xf]
    %v231 = vld [vmem:[#allocation6 + $0x8] sm:$0xf]
    %v232 = vld [vmem:[#allocation6 + $0xc] sm:$0xf]
    %v233 = vld [vmem:[#allocation6 + $0x10] sm:$0xf]
    %v234 = vld [vmem:[#allocation6 + $0x14] sm:$0xf]
    %v235 = vld [vmem:[#allocation6 + $0x18] sm:$0xf]
    %v236 = vld [vmem:[#allocation6 + $0x1c] sm:$0xf]
    %v237 = vld [vmem:[#allocation6 + $0x20] sm:$0xf]
    %v238 = vld [vmem:[#allocation6 + $0x24] sm:$0xf]
    %v239 = vld [vmem:[#allocation6 + $0x28] sm:$0xf]
    %v240 = vld [vmem:[#allocation6 + $0x2c] sm:$0xf]
    %v241 = vld [vmem:[#allocation6 + $0x30] sm:$0xf]
    %v242 = vld [vmem:[#allocation6 + $0x34] sm:$0xf]
    %v243 = vld [vmem:[#allocation6 + $0x38] sm:$0xf]
    %v244 = vld [vmem:[#allocation6 + $0x3c] sm:$0xf]
    %v245 = vld [vmem:[#allocation6 + $0x40] sm:$0xf]
    %v246 = vld [vmem:[#allocation6 + $0x44] sm:$0xf]
    %v247 = vld [vmem:[#allocation6 + $0x48] sm:$0xf]
    %v248 = vld [vmem:[#allocation6 + $0x4c] sm:$0xf]
    %v249 = vld [vmem:[#allocation6 + $0x50] sm:$0xf]
    %v250 = vld [vmem:[#allocation6 + $0x54] sm:$0xf]
    %v251 = vld [vmem:[#allocation6 + $0x58] sm:$0xf]
    %v252 = vld [vmem:[#allocation6 + $0x5c] sm:$0xf]
    %v253 = vld [vmem:[#allocation6 + $0x60] sm:$0xf]
    %v254 = vld [vmem:[#allocation6 + $0x64] sm:$0xf]
    %v255 = vld [vmem:[#allocation6 + $0x68] sm:$0xf]
    %v256 = vld [vmem:[#allocation6 + $0x6c] sm:$0xf]
    %v257 = vld [vmem:[#allocation6 + $0x70] sm:$0xf]
    %v258 = vld [vmem:[#allocation6 + $0x74] sm:$0xf]
    %v259 = vld [vmem:[#allocation6 + $0x78] sm:$0xf]
    %v260 = vld [vmem:[#allocation6 + $0x7c] sm:$0xf]
    %v262 = vunpack.c.l.b16 %v228
    %v263 = vunpack.c.h.b16 %v228
    %v264 = vpack.c.b16 %v262, %v262
    %v265 = vpack.c.b16 %v263, %v263
    %v300 = vunpack.c.l.b16 %v229
    %v301 = vunpack.c.l.b16 %v230
    %v302 = vunpack.c.l.b16 %v231
    %v303 = vunpack.c.l.b16 %v232
    %v304 = vunpack.c.l.b16 %v233
    %v305 = vunpack.c.l.b16 %v234
    %v306 = vunpack.c.l.b16 %v235
    %v307 = vunpack.c.l.b16 %v236
    %v308 = vunpack.c.l.b16 %v237
    %v309 = vunpack.c.l.b16 %v238
    %v310 = vunpack.c.l.b16 %v239
    %v311 = vunpack.c.l.b16 %v240
    %v312 = vunpack.c.l.b16 %v241
    %v313 = vunpack.c.l.b16 %v242
    %v314 = vunpack.c.l.b16 %v243
    %v315 = vunpack.c.l.b16 %v244
    %v316 = vunpack.c.l.b16 %v245
    %v317 = vunpack.c.l.b16 %v246
    %v318 = vunpack.c.l.b16 %v247
    %v319 = vunpack.c.l.b16 %v248
    %v320 = vunpack.c.l.b16 %v249
    %v321 = vunpack.c.l.b16 %v250
    %v322 = vunpack.c.l.b16 %v251
    %v323 = vunpack.c.l.b16 %v252
    %v324 = vunpack.c.l.b16 %v253
    %v325 = vunpack.c.l.b16 %v254
    %v326 = vunpack.c.l.b16 %v255
    %v327 = vunpack.c.l.b16 %v256
    %v328 = vunpack.c.l.b16 %v257
    %v329 = vunpack.c.l.b16 %v258
    %v330 = vunpack.c.l.b16 %v259
    %v331 = vunpack.c.l.b16 %v260
    %v332 = vpack.c.b16 %v301, %v300
    %v333 = vpack.c.b16 %v303, %v302
    %v334 = vpack.c.b16 %v305, %v304
    %v335 = vpack.c.b16 %v307, %v306
    %v336 = vpack.c.b16 %v309, %v308
    %v337 = vpack.c.b16 %v311, %v310
    %v338 = vpack.c.b16 %v313, %v312
    %v339 = vpack.c.b16 %v315, %v314
    %v340 = vpack.c.b16 %v317, %v316
    %v341 = vpack.c.b16 %v319, %v318
    %v342 = vpack.c.b16 %v321, %v320
    %v343 = vpack.c.b16 %v323, %v322
    %v344 = vpack.c.b16 %v325, %v324
    %v345 = vpack.c.b16 %v327, %v326
    %v346 = vpack.c.b16 %v329, %v328
    %v347 = vpack.c.b16 %v331, %v330
    %364 = vmatpush.bf16.msra.mxu0 %v339
    %365 = vmatpush.bf16.msra.mxu0 %v338
    %366 = vmatpush.bf16.msra.mxu0 %v337
    %367 = vmatpush.bf16.msra.mxu0 %v336
    %368 = vmatpush.bf16.msra.mxu0 %v335
    %369 = vmatpush.bf16.msra.mxu0 %v334
    %370 = vmatpush.bf16.msra.mxu0 %v333
    %371 = vmatpush.bf16.msra.mxu0 %v332
    %372 = vmatmul.bf16.gmra.mxu0 %v264
    %v373 = vpop.f32.mrf.mxu0
    %v374 = vadd.f32 0.0, %v373
    %v375 = vpop.f32.mrf.mxu0
    %376 = vdwg.mxu0
    %377 = vmatpush.bf16.msra.mxu0 %v347
    %378 = vmatpush.bf16.msra.mxu0 %v346
    %379 = vmatpush.bf16.msra.mxu0 %v345
    %380 = vmatpush.bf16.msra.mxu0 %v344
    %381 = vmatpush.bf16.msra.mxu0 %v343
    %382 = vmatpush.bf16.msra.mxu0 %v342
    %383 = vmatpush.bf16.msra.mxu0 %v341
    %384 = vmatpush.bf16.msra.mxu0 %v340
    %385 = vmatmul.bf16.gmra.mxu0 %v265
    %v386 = vpop.f32.mrf.mxu0
    %v387 = vadd.f32 %v374, %v386
    %v388 = vpop.f32.mrf.mxu0
    %389 = vdwg.mxu0
    %v390 = vld [vmem:[%s6] sm:$0x1]
    %v392 = vperm.slane %v390, 0
    %v394 = vadd.f32 %v387, %v392
    %vm395 = vcmask 15360
    %396 = vst.msk [vmem:[%s7] sm:$0xff] %vm395, %v394
    // Predicated region
    $region38: #{tpu_custom_call.1} parent=1 // pred_check
      _
    $region39: #{tpu_custom_call.1} parent=1 // pred_check_branch
      %398 = sbr.rel (0) target = $region41
    $region40: #{tpu_custom_call.1} parent=1 // pred_region
      _
    $region41: #{tpu_custom_call.1} parent=1 // pred_fallthru
      _
    // Predicated region
    $region42: #{tpu_custom_call.1} parent=1 // pred_check
      _
    $region43: #{tpu_custom_call.1} parent=1 // pred_check_branch
      %400 = sbr.rel (0) target = $region45
    $region44: #{tpu_custom_call.1} parent=1 // pred_region
      _
    $region45: #{tpu_custom_call.1} parent=1 // pred_fallthru
      _
    %401 = vsyncpa [#allocation5], 1
    %402 = vsyncpa [#allocation7], 1

</llo_original>
